<compile_context>
chip_gen: v7x
topology: tpu7x:2x2x1
jax: 0.10.0
libtpu: 0.0.40
codegen_flags: <defaults>
</compile_context>

<pallas_src>
import functools

import jax
import jax.numpy as jnp
from jax.experimental import pallas as pl
from jax.experimental.pallas import tpu as pltpu

_LANES = 128
_SUBLANES = 8
# Total double-buffered input VMEM per pipeline step (all inputs, both
# buffers).  8 MiB keeps the whole pipeline inside even v5e's 16 MiB default
# scoped-VMEM limit and far under v7x's 64 MiB physical VMEM, while tiles are
# big enough (~2 MiB per buffer) that the ~0.35 us per-step overhead is <10%.
_TILE_BYTE_BUDGET = 8 * 1024 * 1024


# ------------------------------ helpers ------------------------------------ #

def _round_up(x, m):
    return -(-x // m) * m


@functools.lru_cache(maxsize=1)
def _num_tensorcores():
    """Best-effort TensorCores-per-device count (v4/v5p megacore, v7x -> 2)."""
    try:
        kind = str(getattr(jax.devices()[0], "device_kind", "")).lower()
    except Exception:  # pragma: no cover - detection must never break the loss
        return 1
    for tag in ("v4", "v5p", "7x"):
        if tag in kind:
            return 2
    return 1


def _row_align(*itemsizes):
    # Sublane multiple for the narrowest dtype involved (f32->8, bf16->16, i8->32).
    return max(_SUBLANES, 32 // max(1, min(itemsizes)))


def _row_tile(n_rows, pipelined_bytes_per_row, align):
    """Byte-budget row tile: multiple of `align`; >=2 tiles on multi-core chips."""
    if n_rows <= align:
        return max(n_rows, 1)              # block == full dim, always legal
    tile = max(align,
               (_TILE_BYTE_BUDGET // max(pipelined_bytes_per_row, 1))
               // align * align)
    if _num_tensorcores() > 1 and n_rows >= 2 * align:
        # Guarantee at least two tiles so the second TensorCore gets work.
        tile = min(tile, _round_up(-(-n_rows // 2), align))
    return min(tile, _round_up(n_rows, align))


# ------------------------- per-tile loss bodies ---------------------------- #

def _mse_point(x, y):
    d = x - y
    return d * d


def _bce_point(x, y):
    # binary_cross_entropy_with_logits, numerically stable formulation.
    return jnp.maximum(x, 0.0) - x * y + jnp.log1p(jnp.exp(-jnp.abs(x)))


def _elementwise_tile_fn(point_fn, n_valid, tile_rows, width):
    """Returns tile_fn(i, x_ref, y_ref) -> (loss_sum, valid_count)."""
    def tile_fn(i, x_ref, y_ref):
        x = x_ref[...].astype(jnp.float32)
        y = y_ref[...].astype(jnp.float32)
        rows = jax.lax.broadcasted_iota(jnp.int32, x.shape, 0)
        cols = jax.lax.broadcasted_iota(jnp.int32, x.shape, 1)
        # int32 flat index: fine for < 2**31 elements.
        flat = (i * tile_rows + rows) * width + cols
        valid = flat < n_valid
        per = jnp.where(valid, point_fn(x, y), 0.0)      # mask before any reduce
        return jnp.sum(per), jnp.sum(valid.astype(jnp.float32))
    return tile_fn


def _ce_tile_fn(n_rows, tile_rows, ignore_index=-100):
    """F.cross_entropy ('mean', ignore_index=-100) partial over one row tile."""
    def tile_fn(i, logits_ref, labels_ref):
        logits = logits_ref[...].astype(jnp.float32)     # (TR, C)
        labels = labels_ref[...]                         # (TR, 1) int32
        tr, c = logits.shape
        row_ids = i * tile_rows + jax.lax.broadcasted_iota(jnp.int32, (tr, 1), 0)
        valid = (row_ids < n_rows) & (labels != ignore_index)
        row_max = jnp.max(logits, axis=-1, keepdims=True)
        shifted = logits - row_max
        lse = jnp.log(jnp.sum(jnp.exp(shifted), axis=-1, keepdims=True))
        class_ids = jax.lax.broadcasted_iota(jnp.int32, (tr, c), 1)
        # per-row loss = lse - shifted[label]; no full (TR,C) log-softmax temp.
        # TODO(synk): labels outside [0, C) that are not -100 silently contribute
        # `lse` (picked == 0); torch raises an error instead.
        picked = jnp.sum(jnp.where(class_ids == labels, shifted, 0.0),
                         axis=-1, keepdims=True)
        per_row = jnp.where(valid, lse - picked, 0.0)    # mask before row sum
        return jnp.sum(per_row), jnp.sum(valid.astype(jnp.float32))
    return tile_fn


# --------------------------- kernel wrappers -------------------------------- #

def _make_kernel(tile_fn, fused):
    """Wrap a per-tile (loss_sum, count) function into a Pallas kernel body."""
    if fused:
        # 1-TC chips: accumulate across the ("arbitrary") grid axis into the
        # resident (1,1,128) output block and emit the mean in lane 0.
        def kernel(x_ref, y_ref, out_ref):
            i = pl.program_id(0)
            lane = jax.lax.broadcasted_iota(jnp.int32, out_ref.shape, 2)

            @pl.when(i == 0)
            def _():
                out_ref[...] = jnp.zeros_like(out_ref)

            loss_sum, count = tile_fn(i, x_ref, y_ref)
            out_ref[...] += jnp.where(lane == 0, loss_sum,
                                      jnp.where(lane == 1, count, 0.0))

            @pl.when(i == pl.num_programs(0) - 1)
            def _():
                acc = out_ref[...]
                num = jnp.sum(jnp.where(lane == 0, acc, 0.0))
                den = jnp.sum(jnp.where(lane == 1, acc, 0.0))
                out_ref[...] = jnp.where(lane == 0, num / den, 0.0)
        return kernel

    # Multi-TC chips: one lane-dense (1,1,128) partial per tile (loss in lane 0,
    # count in lane 1); tiles shard across cores via "parallel" semantics.
    def kernel(x_ref, y_ref, out_ref):
        i = pl.program_id(0)
        lane = jax.lax.broadcasted_iota(jnp.int32, out_ref.shape, 2)
        loss_sum, count = tile_fn(i, x_ref, y_ref)
        out_ref[...] = jnp.where(lane == 0, loss_sum,
                                 jnp.where(lane == 1, count, 0.0))
    return kernel


def _mean_loss_call(tile_fn, x, y, x_block, y_block, n_rows, tile, cost):
    num_tiles = int(pl.cdiv(n_rows, tile))
    fused = _num_tensorcores() <= 1
    kernel = _make_kernel(tile_fn, fused)

    if fused:
        out_rows = 1
        out_index = lambda i: (0, 0, 0)            # resident accumulator block
        semantics = ("arbitrary",)
    else:
        out_rows = num_tiles
        out_index = lambda i: (i, 0, 0)            # one partial per tile
        semantics = ("parallel",)

    out = pl.pallas_call(
        kernel,
        out_shape=jax.ShapeDtypeStruct((out_rows, 1, _LANES), jnp.float32),
        grid_spec=pltpu.PrefetchScalarGridSpec(
            num_scalar_prefetch=0,
            grid=(num_tiles,),
            in_specs=[
                pl.BlockSpec(x_block, lambda i: (i, 0)),
                pl.BlockSpec(y_block, lambda i: (i, 0)),
            ],
            out_specs=pl.BlockSpec((1, 1, _LANES), out_index),
        ),
        compiler_params=pltpu.CompilerParams(dimension_semantics=semantics),
        cost_estimate=cost,
    )(x, y)

    if fused:
        return out[0, 0, 0]
    # Tiny final reduction (num_tiles elements) in plain JAX.
    return jnp.sum(out[:, 0, 0]) / jnp.sum(out[:, 0, 1])


# --------------------------- loss entry points ------------------------------ #

def _elementwise_mean(x, y, point_fn, flops_per_elem, transc_per_elem):
    n = int(x.size)
    if int(y.size) != n:
        raise ValueError("logits and labels must have the same number of elements")

    if n % _LANES == 0:
        # Free reshape to a lane-dense (rows, 128) view.
        x2 = x.reshape(n // _LANES, _LANES)
        y2 = y.reshape(n // _LANES, _LANES)
    elif x.ndim >= 2 and x.shape == y.shape:
        # Keep the natural trailing-dim layout: no host-side copy of the big
        # tensor; the (possibly <128) lane dim equals the full array dim.
        x2 = x.reshape(-1, x.shape[-1])
        y2 = y.reshape(-1, y.shape[-1])
    else:
        # Tiny 1-D case (regression head): pad the flat vector to a 128-lane row.
        pad = _round_up(n, _LANES) - n
        x2 = jnp.pad(x.reshape(-1), (0, pad)).reshape(-1, _LANES)
        y2 = jnp.pad(y.reshape(-1), (0, pad)).reshape(-1, _LANES)

    rows, width = int(x2.shape[0]), int(x2.shape[1])
    width_vmem = _round_up(width, _LANES)        # lane padding in VMEM
    per_row_bytes = 2 * width_vmem * (x2.dtype.itemsize + y2.dtype.itemsize)
    align = _row_align(x2.dtype.itemsize, y2.dtype.itemsize)
    tile = _row_tile(rows, per_row_bytes, align)

    tile_fn = _elementwise_tile_fn(point_fn, n, tile, width)
    cost = pl.CostEstimate(
        flops=int(flops_per_elem * n),
        transcendentals=int(transc_per_elem * n),
        bytes_accessed=int(n * (x2.dtype.itemsize + y2.dtype.itemsize)))
    return _mean_loss_call(tile_fn, x2, y2, (tile, width), (tile, width),
                           rows, tile, cost)


def _cross_entropy_mean(logits, labels, num_labels):
    x = logits.reshape(-1, num_labels)            # original dtype over the DMA
    y = labels.reshape(-1, 1).astype(jnp.int32)
    rows, c = int(x.shape[0]), int(x.shape[1])
    c_vmem = _round_up(c, _LANES)
    # Labels occupy a full 128-lane row in VMEM regardless of their width of 1,
    # so charge them at 128 lanes in the byte budget.
    per_row_bytes = 2 * c_vmem * x.dtype.itemsize + 2 * _LANES * 4
    align = _row_align(x.dtype.itemsize, 4)
    tile = _row_tile(rows, per_row_bytes, align)

    tile_fn = _ce_tile_fn(rows, tile)
    cost = pl.CostEstimate(
        flops=int(6 * rows * c),
        transcendentals=int(rows * (c + 1)),
        bytes_accessed=int(rows * c * x.dtype.itemsize + rows * 4))
    return _mean_loss_call(tile_fn, x, y, (tile, c), (tile, 1),
                           rows, tile, cost)


# --------------------------- module wrapper --------------------------------- #

class Config:
    """Minimal stand-in for `PretrainedConfig`."""

    def __init__(self, num_labels, problem_type=None):
        self.num_labels = num_labels
        self.problem_type = problem_type


def _infer_problem_type(config, labels):
    # Same inference rule as the torch module, but WITHOUT mutating `config`
    # (keeps the function pure / retrace-friendly).
    if config.problem_type is not None:
        return config.problem_type
    if config.num_labels == 1:
        return "regression"
    if config.num_labels > 1:
        if jnp.issubdtype(labels.dtype, jnp.integer):
            return "single_label_classification"
        return "multi_label_classification"
    raise ValueError("num_labels must be >= 1 to infer the problem type")


def sequence_classification_loss(config, logits, labels):
    """Mirrors SequenceClassificationLoss.forward (problem-type inference + loss)."""
    problem_type = _infer_problem_type(config, labels)

    if problem_type == "regression":
        if config.num_labels == 1:
            logits = jnp.squeeze(logits)
            labels = jnp.squeeze(labels)
        # F.mse_loss(logits, labels), 'mean' reduction.
        return _elementwise_mean(logits, labels, _mse_point,
                                 flops_per_elem=3, transc_per_elem=0)

    if problem_type == "single_label_classification":
        # F.cross_entropy(logits.view(-1, C), labels.flatten()), 'mean'.
        return _cross_entropy_mean(logits, labels, config.num_labels)

    if problem_type == "multi_label_classification":
        # F.binary_cross_entropy_with_logits(logits, labels), 'mean'.
        return _elementwise_mean(logits, labels, _bce_point,
                                 flops_per_elem=6, transc_per_elem=2)

    raise ValueError(f"unknown problem_type: {problem_type}")


# ------------------------------- main ---------------------------------------- #

if __name__ == "__main__":
    key = jax.random.PRNGKey(0)
    k1, k2, k3, k4, k5 = jax.random.split(key, 5)

    B, C = 8, 4

    # 1) regression: num_labels == 1, float labels -> MSE
    reg_logits = jax.random.normal(k1, (B, 1), jnp.float32)
    reg_labels = jax.random.normal(k2, (B,), jnp.float32)
    mse = sequence_classification_loss(Config(num_labels=1), reg_logits, reg_labels)
    d = reg_logits.squeeze() - reg_labels.squeeze()
    mse_ref = jnp.mean(d * d)

    # 2) single-label classification: num_labels > 1, int labels -> cross entropy
    cls_logits = jax.random.normal(k3, (B, C), jnp.float32)
    cls_labels = jax.random.randint(k4, (B,), 0, C, jnp.int32)
    ce = sequence_classification_loss(Config(num_labels=C), cls_logits, cls_labels)
    logp_ref = jax.nn.log_softmax(cls_logits, axis=-1)
    ce_ref = -jnp.mean(jnp.take_along_axis(logp_ref, cls_labels[:, None], axis=-1))

    # 2b) same but bf16 logits stay bf16 over the DMA (cast to f32 in-kernel)
    cls_logits_bf16 = cls_logits.astype(jnp.bfloat16)
    ce_bf16 = sequence_classification_loss(Config(num_labels=C), cls_logits_bf16,
                                           cls_labels)
    logp_bf16_ref = jax.nn.log_softmax(cls_logits_bf16.astype(jnp.float32), axis=-1)
    ce_bf16_ref = -jnp.mean(
        jnp.take_along_axis(logp_bf16_ref, cls_labels[:, None], axis=-1))

    # 3) multi-label classification: num_labels > 1, float labels -> BCE-with-logits
    ml_logits = jax.random.normal(k5, (B, C), jnp.float32)
    ml_labels = (jax.random.uniform(k1, (B, C)) > 0.5).astype(jnp.float32)
    bce = sequence_classification_loss(Config(num_labels=C), ml_logits, ml_labels)
    bce_ref = jnp.mean(
        jnp.maximum(ml_logits, 0.0)
        - ml_logits * ml_labels
        + jnp.log1p(jnp.exp(-jnp.abs(ml_logits)))
    )

    mse, ce, ce_bf16, bce = jax.block_until_ready((mse, ce, ce_bf16, bce))

    assert jnp.allclose(mse, mse_ref, atol=1e-5), (mse, mse_ref)
    assert jnp.allclose(ce, ce_ref, atol=1e-5), (ce, ce_ref)
    assert jnp.allclose(ce_bf16, ce_bf16_ref, atol=1e-4), (ce_bf16, ce_bf16_ref)
    assert jnp.allclose(bce, bce_ref, atol=1e-5), (bce, bce_ref)

    print("KERNEL_OK")
</pallas_src>

<mosaic_0001>
module attributes {stable_mosaic.version = 11 : i64} {
  func.func @kernel(%arg0: i32, %arg1: memref<1x128xf32, #tpu.memory_space<vmem>>, %arg2: memref<1x128xf32, #tpu.memory_space<vmem>>, %arg3: memref<1x1x128xf32, #tpu.memory_space<vmem>>) attributes {dimension_semantics = [#tpu.dimension_semantics<arbitrary>], iteration_bounds = array<i64: 1>, scalar_prefetch = 0 : i64, scratch_operands = 0 : i64, tpu.core_type = #tpu.core_type<tc>, window_params = [{transform_indices = @transform_0, window_bounds = array<i64: 1, 128>}, {transform_indices = @transform_1, window_bounds = array<i64: 1, 128>}, {pipeline_mode = #tpu.pipeline_mode<synchronous>, transform_indices = @transform_2, window_bounds = array<i64: 1, 1, 128>}]} {
    %0 = tpu.iota {dimensions = array<i32: 2>} : vector<1x1x128xi32>
    %c0_i32 = arith.constant 0 : i32
    %1 = arith.cmpi eq, %arg0, %c0_i32 : i32
    %2 = arith.extui %1 : i1 to i32
    %c0_i32_0 = arith.constant 0 : i32
    %3 = arith.cmpi ne, %2, %c0_i32_0 : i32
    scf.if %3 {
      %cst_17 = arith.constant 0.000000e+00 : f32
      %45 = vector.broadcast %cst_17 : f32 to vector<1x1x128xf32>
      %c0_18 = arith.constant 0 : index
      %c0_19 = arith.constant 0 : index
      %c0_20 = arith.constant 0 : index
      %46 = vector.load %arg3[%c0_18, %c0_19, %c0_20] : memref<1x1x128xf32, #tpu.memory_space<vmem>>, vector<1x1x128xf32>
      tpu.vector_store %arg3[%c0_18, %c0_19, %c0_20], %45 {strides = array<i32>} : memref<1x1x128xf32, #tpu.memory_space<vmem>>, vector<1x1x128xf32>,
    } else {
    }
    %c0 = arith.constant 0 : index
    %c0_1 = arith.constant 0 : index
    %4 = vector.load %arg1[%c0, %c0_1] : memref<1x128xf32, #tpu.memory_space<vmem>>, vector<1x128xf32>
    %c0_2 = arith.constant 0 : index
    %c0_3 = arith.constant 0 : index
    %5 = vector.load %arg2[%c0_2, %c0_3] : memref<1x128xf32, #tpu.memory_space<vmem>>, vector<1x128xf32>
    %6 = tpu.iota {dimensions = array<i32: 0>} : vector<1x128xi32>
    %7 = tpu.iota {dimensions = array<i32: 1>} : vector<1x128xi32>
    %c1_i32 = arith.constant 1 : i32
    %8 = arith.muli %arg0, %c1_i32 : i32
    %9 = vector.broadcast %8 : i32 to vector<1x128xi32>
    %10 = arith.addi %9, %6 : vector<1x128xi32>
    %c128_i32 = arith.constant 128 : i32
    %11 = vector.broadcast %c128_i32 : i32 to vector<1x128xi32>
    %12 = arith.muli %10, %11 : vector<1x128xi32>
    %13 = arith.addi %12, %7 : vector<1x128xi32>
    %c8_i32 = arith.constant 8 : i32
    %14 = vector.broadcast %c8_i32 : i32 to vector<1x128xi32>
    %15 = arith.cmpi slt, %13, %14 : vector<1x128xi32>
    %16 = arith.subf %4, %5 : vector<1x128xf32>
    %17 = arith.mulf %16, %16 : vector<1x128xf32>
    %cst = arith.constant 0.000000e+00 : f32
    %18 = vector.broadcast %cst : f32 to vector<1x128xf32>
    %19 = arith.select %15, %17, %18 : vector<1x128xi1>, vector<1x128xf32>
    %20 = vector.shape_cast %19 : vector<1x128xf32> to vector<1x1x128xf32>
    %cst_4 = arith.constant dense<0.000000e+00> : vector<1xf32>
    %21 = vector.multi_reduction <add>, %20, %cst_4 [1, 2] : vector<1x1x128xf32> to vector<1xf32>
    %22 = vector.shape_cast %21 : vector<1xf32> to vector<1x1x1xf32>
    %23 = vector.extract %22[0, 0, 0] : f32 from vector<1x1x1xf32>
    %24 = arith.extui %15 : vector<1x128xi1> to vector<1x128xi32>
    %25 = arith.sitofp %24 : vector<1x128xi32> to vector<1x128xf32>
    %26 = vector.shape_cast %25 : vector<1x128xf32> to vector<1x1x128xf32>
    %cst_5 = arith.constant dense<0.000000e+00> : vector<1xf32>
    %27 = vector.multi_reduction <add>, %26, %cst_5 [1, 2] : vector<1x1x128xf32> to vector<1xf32>
    %28 = vector.shape_cast %27 : vector<1xf32> to vector<1x1x1xf32>
    %29 = vector.extract %28[0, 0, 0] : f32 from vector<1x1x1xf32>
    %c0_6 = arith.constant 0 : index
    %c0_7 = arith.constant 0 : index
    %c0_8 = arith.constant 0 : index
    %30 = vector.load %arg3[%c0_6, %c0_7, %c0_8] : memref<1x1x128xf32, #tpu.memory_space<vmem>>, vector<1x1x128xf32>
    %c0_i32_9 = arith.constant 0 : i32
    %31 = vector.broadcast %c0_i32_9 : i32 to vector<1x1x128xi32>
    %32 = arith.cmpi eq, %0, %31 : vector<1x1x128xi32>
    %c1_i32_10 = arith.constant 1 : i32
    %33 = vector.broadcast %c1_i32_10 : i32 to vector<1x1x128xi32>
    %34 = arith.cmpi eq, %0, %33 : vector<1x1x128xi32>
    %cst_11 = arith.constant 0.000000e+00 : f32
    %35 = vector.broadcast %29 : f32 to vector<1x1x128xf32>
    %36 = vector.broadcast %cst_11 : f32 to vector<1x1x128xf32>
    %37 = arith.select %34, %35, %36 : vector<1x1x128xi1>, vector<1x1x128xf32>
    %38 = vector.broadcast %23 : f32 to vector<1x1x128xf32>
    %39 = arith.select %32, %38, %37 : vector<1x1x128xi1>, vector<1x1x128xf32>
    %40 = arith.addf %30, %39 : vector<1x1x128xf32>
    %c0_12 = arith.constant 0 : index
    %c0_13 = arith.constant 0 : index
    %c0_14 = arith.constant 0 : index
    %41 = vector.load %arg3[%c0_12, %c0_13, %c0_14] : memref<1x1x128xf32, #tpu.memory_space<vmem>>, vector<1x1x128xf32>
    tpu.vector_store %arg3[%c0_12, %c0_13, %c0_14], %40 {strides = array<i32>} : memref<1x1x128xf32, #tpu.memory_space<vmem>>, vector<1x1x128xf32>,
    %c0_i32_15 = arith.constant 0 : i32
    %42 = arith.cmpi eq, %arg0, %c0_i32_15 : i32
    %43 = arith.extui %42 : i1 to i32
    %c0_i32_16 = arith.constant 0 : i32
    %44 = arith.cmpi ne, %43, %c0_i32_16 : i32
    scf.if %44 {
      %c0_17 = arith.constant 0 : index
      %c0_18 = arith.constant 0 : index
      %c0_19 = arith.constant 0 : index
      %45 = vector.load %arg3[%c0_17, %c0_18, %c0_19] : memref<1x1x128xf32, #tpu.memory_space<vmem>>, vector<1x1x128xf32>
      %c0_i32_20 = arith.constant 0 : i32
      %46 = vector.broadcast %c0_i32_20 : i32 to vector<1x1x128xi32>
      %47 = arith.cmpi eq, %0, %46 : vector<1x1x128xi32>
      %cst_21 = arith.constant 0.000000e+00 : f32
      %48 = vector.broadcast %cst_21 : f32 to vector<1x1x128xf32>
      %49 = arith.select %47, %45, %48 : vector<1x1x128xi1>, vector<1x1x128xf32>
      %50 = vector.shape_cast %49 : vector<1x1x128xf32> to vector<1x1x1x128xf32>
      %cst_22 = arith.constant dense<0.000000e+00> : vector<1xf32>
      %51 = vector.multi_reduction <add>, %50, %cst_22 [1, 2, 3] : vector<1x1x1x128xf32> to vector<1xf32>
      %52 = vector.shape_cast %51 : vector<1xf32> to vector<1x1x1x1xf32>
      %53 = vector.extract %52[0, 0, 0, 0] : f32 from vector<1x1x1x1xf32>
      %c1_i32_23 = arith.constant 1 : i32
      %54 = vector.broadcast %c1_i32_23 : i32 to vector<1x1x128xi32>
      %55 = arith.cmpi eq, %0, %54 : vector<1x1x128xi32>
      %cst_24 = arith.constant 0.000000e+00 : f32
      %56 = vector.broadcast %cst_24 : f32 to vector<1x1x128xf32>
      %57 = arith.select %55, %45, %56 : vector<1x1x128xi1>, vector<1x1x128xf32>
      %58 = vector.shape_cast %57 : vector<1x1x128xf32> to vector<1x1x1x128xf32>
      %cst_25 = arith.constant dense<0.000000e+00> : vector<1xf32>
      %59 = vector.multi_reduction <add>, %58, %cst_25 [1, 2, 3] : vector<1x1x1x128xf32> to vector<1xf32>
      %60 = vector.shape_cast %59 : vector<1xf32> to vector<1x1x1x1xf32>
      %61 = vector.extract %60[0, 0, 0, 0] : f32 from vector<1x1x1x1xf32>
      %c0_i32_26 = arith.constant 0 : i32
      %62 = vector.broadcast %c0_i32_26 : i32 to vector<1x1x128xi32>
      %63 = arith.cmpi eq, %0, %62 : vector<1x1x128xi32>
      %64 = arith.divf %53, %61 : f32
      %cst_27 = arith.constant 0.000000e+00 : f32
      %65 = vector.broadcast %64 : f32 to vector<1x1x128xf32>
      %66 = vector.broadcast %cst_27 : f32 to vector<1x1x128xf32>
      %67 = arith.select %63, %65, %66 : vector<1x1x128xi1>, vector<1x1x128xf32>
      %c0_28 = arith.constant 0 : index
      %c0_29 = arith.constant 0 : index
      %c0_30 = arith.constant 0 : index
      %68 = vector.load %arg3[%c0_28, %c0_29, %c0_30] : memref<1x1x128xf32, #tpu.memory_space<vmem>>, vector<1x1x128xf32>
      tpu.vector_store %arg3[%c0_28, %c0_29, %c0_30], %67 {strides = array<i32>} : memref<1x1x128xf32, #tpu.memory_space<vmem>>, vector<1x1x128xf32>,
    } else {
    }
    return
  }
  func.func @transform_0(%arg0: i32) -> (i32, i32) {
    %c0_i32 = arith.constant 0 : i32
    %c0_i32_0 = arith.constant 0 : i32
    return %arg0, %c0_i32 : i32, i32
  }
  func.func @transform_1(%arg0: i32) -> (i32, i32) {
    %c0_i32 = arith.constant 0 : i32
    %c0_i32_0 = arith.constant 0 : i32
    return %arg0, %c0_i32 : i32, i32
  }
  func.func @transform_2(%arg0: i32) -> (i32, i32, i32) {
    %c0_i32 = arith.constant 0 : i32
    %c0_i32_0 = arith.constant 0 : i32
    %c0_i32_1 = arith.constant 0 : i32
    %c0_i32_2 = arith.constant 0 : i32
    return %c0_i32, %c0_i32_0, %c0_i32_1 : i32, i32, i32
  }
}

</mosaic_0001>

<llo_original>
// kernel: tpu_custom_call.1
$region0: #{tpu_custom_call.1}
  #allocation0 [shape = 'u32[]', space=smem, size = 0x4, offset = 0x4, fixed_abs, tag = 'smem constant byte address 0x4 - core index']
  #allocation1 [shape = 'u32[144,128]{1,0:T(1,128)}', space=vmem, size = 0x12000, scoped, tag = 'internal scratch']
  %s0 = inlined_call_operand.hbm [shape: f32[1,128], index: 0, kind: input, shape index: {}]
  %s1 = inlined_call_operand.vmem [shape: f32[1,128], index: 1, kind: input, shape index: {}]
  %s2 = inlined_call_operand.hbm [shape: f32[1,1,128], index: 2, kind: output, shape index: {}]
  %s3 = sld [smem:[#allocation0]]
  $region30: #{tpu_custom_call.1} parent=0
    _
  %s5 = ssub.s32 1, %s3
  %s6 = scalar_select 0, %s5, %s3
  $region1: #{tpu_custom_call.1} parent=0
    #allocation2 [shape = 'u8[512]{0}', space=vmem, size = 0x400, scoped, tag = 'input window, operand 0, single buffered']
    #allocation3 [shape = 's32[1]{0}', space=sflag, size = 0x4, scoped, tag = 'scoped memory for tpu_custom_call.1']
    #allocation4 [shape = 's32[1]{0}', space=sflag, size = 0x4, scoped, tag = 'scoped memory for tpu_custom_call.1']
    #allocation5 [shape = 'u8[512]{0}', space=vmem, size = 0x400, scoped, tag = 'output window, operand 0, single buffered']
    %7 = vsyncpa [#allocation3], 0
    %8 = vsyncpa [#allocation4], 0
    // Predicated region
    $region2: #{tpu_custom_call.1} parent=1 // pred_check
      _
    $region3: #{tpu_custom_call.1} parent=1 // pred_check_branch
      %10 = sbr.rel (0) target = $region5
    $region4: #{tpu_custom_call.1} parent=1 // pred_region
      %s12 = ssub.s32 16, 16
      %13 = vsyncadd [#allocation3], %s12
      %s15 = sshll.u32 [#allocation2], 4
      %s16 = int_to_ptr.vmem [resolvable:$true] %s15
      %18 = dma.hbm_to_vmem [thread:$0]  %s0, 16, %s16, [#allocation3]
    $region5: #{tpu_custom_call.1} parent=1 // pred_fallthru
      _
    // Predicated region
    $region6: #{tpu_custom_call.1} parent=1 // pred_check
      _
    $region7: #{tpu_custom_call.1} parent=1 // pred_check_branch
      %20 = sbr.rel (0) target = $region9
    $region8: #{tpu_custom_call.1} parent=1 // pred_region
      _
    $region9: #{tpu_custom_call.1} parent=1 // pred_fallthru
      _
    // Predicated region
    $region10: #{tpu_custom_call.1} parent=1 // pred_check
      _
    $region11: #{tpu_custom_call.1} parent=1 // pred_check_branch
      %22 = sbr.rel (0) target = $region13
    $region12: #{tpu_custom_call.1} parent=1 // pred_region
      %23 = dma.done [#allocation3], 16
    $region13: #{tpu_custom_call.1} parent=1 // pred_fallthru
      _
    %v24 = vlaneseq
    %v25 = vand.u32 %v24, 127
    %p26 = scmp.eq.s32.totalorder 0, 0
    // Predicated region
    $region14: #{tpu_custom_call.1} parent=1 // pred_check
      %p27 = pneg %p26
    $region15: #{tpu_custom_call.1} parent=1 // pred_check_branch
      %29 = sbr.rel (%p27) target = $region17
    $region16: #{tpu_custom_call.1} parent=1 // pred_region
      %30 = vst [vmem:[#allocation5] sm:$0x1] 0.0
    $region17: #{tpu_custom_call.1} parent=1 // pred_fallthru
      _
    %v31 = vld [vmem:[#allocation2] sm:$0x1]
    %v32 = vld [vmem:[%s1] sm:$0x1]
    %v33 = vlaneseq
    %v34 = vshrl.u32 %v33, 7
    %v35 = vstv 0
    %v36 = vadd.s32 %v35, %v34
    %v37 = vmul.u32 %v36, 128
    %v38 = vadd.s32 %v37, %v25
    %vm39 = vcmp.lt.s32.totalorder %v38, 8
    %v40 = vsub.f32 %v31, %v32
    %v41 = vmul.f32 %v40, %v40
    %v42 = vsel %vm39, %v41, 0.0
    %vm43 = vcmask 1040384
    %v44 = vsel %vm43, %v42, 0.0
    %45 = vadd.xlane.f32.xlu0 %v44
    %v46 = vpop.xlane.xlu0 %45
    %v47 = vrot.slane %v46, 4
    %v48 = vadd.f32 %v46, %v47
    %v49 = vrot.slane %v48, 2
    %v50 = vadd.f32 %v48, %v49
    %v51 = vrot.slane %v50, 1
    %v52 = vadd.f32 %v50, %v51
    %s53 = vtos %v52
    %v54 = vsel %vm39, 1, 0
    %v55 = vcvt.s32.f32 %v54
    %v56 = vsel %vm43, %v55, 0.0
    %57 = vadd.xlane.f32.xlu0 %v56
    %v58 = vpop.xlane.xlu0 %57
    %v59 = vrot.slane %v58, 4
    %v60 = vadd.f32 %v58, %v59
    %v61 = vrot.slane %v60, 2
    %v62 = vadd.f32 %v60, %v61
    %v63 = vrot.slane %v62, 1
    %v64 = vadd.f32 %v62, %v63
    %s65 = vtos %v64
    %v66 = vld [vmem:[#allocation5] sm:$0x1]
    %vm67 = vcmp.eq.s32.totalorder %v25, 0
    %vm68 = vcmp.eq.s32.totalorder %v25, 1
    %v69 = vstv %s65
    %v70 = vsel %vm68, %v69, 0.0
    %v71 = vstv %s53
    %v72 = vsel %vm67, %v71, %v70
    %v73 = vadd.f32 %v66, %v72
    %74 = vst [vmem:[#allocation5] sm:$0x1] %v73
    // Predicated region
    $region18: #{tpu_custom_call.1} parent=1 // pred_check
      %p75 = pneg %p26
    $region19: #{tpu_custom_call.1} parent=1 // pred_check_branch
      %77 = sbr.rel (%p75) target = $region21
    $region20: #{tpu_custom_call.1} parent=1 // pred_region
      %v78 = vld [vmem:[#allocation5] sm:$0x1]
      %v79 = vsel %vm67, %v78, 0.0
      %v80 = vsel %vm43, %v79, 0.0
      %81 = vadd.xlane.f32.xlu0 %v80
      %v82 = vpop.xlane.xlu0 %81
      %v83 = vrot.slane %v82, 4
      %v84 = vadd.f32 %v82, %v83
      %v85 = vrot.slane %v84, 2
      %v86 = vadd.f32 %v84, %v85
      %v87 = vrot.slane %v86, 1
      %v88 = vadd.f32 %v86, %v87
      %s89 = vtos %v88
      %v90 = vsel %vm68, %v78, 0.0
      %v91 = vsel %vm43, %v90, 0.0
      %92 = vadd.xlane.f32.xlu0 %v91
      %v93 = vpop.xlane.xlu0 %92
      %v94 = vrot.slane %v93, 4
      %v95 = vadd.f32 %v93, %v94
      %v96 = vrot.slane %v95, 2
      %v97 = vadd.f32 %v95, %v96
      %v98 = vrot.slane %v97, 1
      %v99 = vadd.f32 %v97, %v98
      %s100 = vtos %v99
      %v101 = vstv %s100
      %v102 = vrcp.pop %v101
      %s103 = vtos %v102
      %s104 = smul.f32 %s89, %s103
      %v105 = vstv %s104
      %v106 = vsel %vm67, %v105, 0.0
      %107 = vst [vmem:[#allocation5] sm:$0x1] %v106
    $region21: #{tpu_custom_call.1} parent=1 // pred_fallthru
      _
    // Predicated region
    $region22: #{tpu_custom_call.1} parent=1 // pred_check
      _
    $region23: #{tpu_custom_call.1} parent=1 // pred_check_branch
      %109 = sbr.rel (0) target = $region25
    $region24: #{tpu_custom_call.1} parent=1 // pred_region
      %s111 = ssub.s32 16, 16
      %112 = vsyncadd [#allocation4], %s111
      %s114 = sshll.u32 [#allocation5], 4
      %s115 = int_to_ptr.vmem [resolvable:$true] %s114
      %117 = dma.vmem_to_hbm [thread:$0]  %s115, 16, %s2, [#allocation4]
    $region25: #{tpu_custom_call.1} parent=1 // pred_fallthru
      _
    // Predicated region
    $region26: #{tpu_custom_call.1} parent=1 // pred_check
      _
    $region27: #{tpu_custom_call.1} parent=1 // pred_check_branch
      %119 = sbr.rel (0) target = $region29
    $region28: #{tpu_custom_call.1} parent=1 // pred_region
      %120 = dma.done [#allocation4], 16
    $region29: #{tpu_custom_call.1} parent=1 // pred_fallthru
      _
    %121 = vsyncpa [#allocation3], 1
    %122 = vsyncpa [#allocation4], 1

</llo_original>
